<compile_context>
chip_gen: v5e
topology: v5e:2x2
jax: 0.10.0
libtpu: 0.0.40
codegen_flags: <defaults>
</compile_context>

<pallas_src>
import jax
import jax.numpy as jnp
from jax.experimental import pallas as pl
from jax.experimental.pallas import tpu as pltpu


def imagine_layer(x: jax.Array) -> jax.Array:
    """ImagineLayer.forward — identity. Recommended path: move zero bytes."""
    return x


def _identity_dma_kernel(x_hbm, o_hbm, sem):
    # One HBM->HBM DMA: streams all bytes at the HBM roofline with a single
    # descriptor. No VMEM staging, no vld/vst bundle slots, no grid-step cost.
    cp = pltpu.make_async_copy(x_hbm, o_hbm, sem)
    cp.start()
    cp.wait()


def imagine_layer_pallas(x: jax.Array) -> jax.Array:
    """Pallas custom-call variant of ImagineLayer (identity copy).

    Use this only when an actual Pallas boundary / fresh output buffer is
    needed; otherwise prefer `imagine_layer`, which is free.
    """
    if x.size == 0:
        return x

    nbytes = x.size * jnp.dtype(x.dtype).itemsize
    return pl.pallas_call(
        _identity_dma_kernel,
        out_shape=jax.ShapeDtypeStruct(x.shape, x.dtype),
        in_specs=[pl.BlockSpec(memory_space=pl.ANY)],
        out_specs=pl.BlockSpec(memory_space=pl.ANY),
        scratch_shapes=[pltpu.SemaphoreType.DMA(())],
        cost_estimate=pl.CostEstimate(
            flops=0, transcendentals=0, bytes_accessed=2 * nbytes
        ),
    )(x)


if __name__ == "__main__":
    # ImagineLayer has no parameters (empty __init__), so nothing to init.
    key = jax.random.PRNGKey(0)
    x = jax.random.normal(key, (2, 4, 16, 16), dtype=jnp.float32)  # NCHW

    # Zero-cost identity path (the real optimization).
    y0 = imagine_layer(x)

    # Pallas custom-call path: single HBM->HBM DMA.
    fwd = jax.jit(imagine_layer_pallas)
    y = fwd(x)
    jax.block_until_ready(y)

    assert y0.shape == x.shape and y0.dtype == x.dtype
    assert y.shape == x.shape and y.dtype == x.dtype
    assert bool(jnp.all(y0 == x))
    assert bool(jnp.all(y == x))
    print("KERNEL_OK")
</pallas_src>

<mosaic_0001>
module attributes {stable_mosaic.version = 11 : i64} {
  func.func @_identity_dma_kernel(%arg0: memref<2x4x16x16xf32, #tpu.memory_space<any>>, %arg1: memref<2x4x16x16xf32, #tpu.memory_space<any>>, %arg2: memref<!tpu.dma_semaphore, #tpu.memory_space<semaphore_mem>>) attributes {dimension_semantics = [], scalar_prefetch = 0 : i64, scratch_operands = 1 : i64, tpu.core_type = #tpu.core_type<tc>} {
    tpu.enqueue_dma source(%arg0 : memref<2x4x16x16xf32, #tpu.memory_space<any>>) target(%arg1 : memref<2x4x16x16xf32, #tpu.memory_space<any>>) target_semaphore(%arg2 : memref<!tpu.dma_semaphore, #tpu.memory_space<semaphore_mem>>)
    tpu.wait_dma2 semaphore(%arg2 : memref<!tpu.dma_semaphore, #tpu.memory_space<semaphore_mem>>) src(%arg0 : memref<2x4x16x16xf32, #tpu.memory_space<any>>) dst(%arg1 : memref<2x4x16x16xf32, #tpu.memory_space<any>>)
    return
  }
}

</mosaic_0001>

<llo_original>
// kernel: imagine_layer_pallas.1
$region0: #{imagine_layer_pallas.1}
  #allocation0 [shape = 'u32[]', space=smem, size = 0x4, offset = 0x4, fixed_abs, tag = 'smem constant byte address 0x4 - core index']
  #allocation1 [shape = 'u32[72,128]{1,0:T(1,128)}', space=vmem, size = 0x9000, scoped, tag = 'internal scratch']
  #allocation2 [shape = 's32[1]{0}', space=sflag, size = 0x4, scoped, tag = 'scratch operand']
  #allocation3 [shape = 's32[]', space=sflag, size = 0x4, offset = 0, fixed_abs, tag = 'sflag constant byte address 0x0 - dummy sync flag']
  #allocation4 [shape = 'u32[0]{0}', space=smem, size = 0, offset = 0, fixed_abs, tag = 'smem constant byte address 0x0 - null']
  %s0 = inlined_call_operand.hbm [shape: f32[2,4,16,16], index: 0, kind: input, shape index: {}]
  %s1 = inlined_call_operand.hbm [shape: f32[2,4,16,16], index: 1, kind: output, shape index: {}]
  %s2 = sld [smem:[#allocation0]]
  $region2: #{imagine_layer_pallas.1} parent=0
    _
  %s4 = ssub.s32 1, %s2
  %s5 = scalar_select 0, %s4, %s2
  %s7 = sshll.u32 1, 14
  %s8 = sxor.u32 4294967295, %s7
  %s10 = sshll.u32 %s0, 4
  %s11 = int_to_ptr.hbm [resolvable:$true] %s10
  %s12 = sshll.u32 %s1, 4
  %s13 = int_to_ptr.hbm [resolvable:$true] %s12
  %16 = dma.general %s11, 2048, %s13, [#allocation2], [#allocation3], [#allocation4], 0, 0
  %s17 = smul.u32 2, 4
  %s18 = smul.u32 %s17, 16
  %s19 = smul.u32 %s18, 1
  %s20 = sshll.u32 %s19, 4
  %21 = dma.done [#allocation2], %s20
  %22 = vsyncmov [#allocation2]
  %s23 = vpop.sfrf %22
  %p24 = scmp.eq.s32.totalorder %s23, 0
  %p25 = pneg %p24
  %27 = shalt.err (%p25)

</llo_original>
